<compile_context>
chip_gen: v7x
topology: tpu7x:2x2x1
jax: 0.10.0
libtpu: 0.0.40
codegen_flags: <defaults>
</compile_context>

<pallas_src>
import functools

import jax
import jax.numpy as jnp
import numpy as np
from jax.experimental import pallas as pl
from jax.experimental.pallas import tpu as pltpu


def _stat_linear_kernel(x_ref, wm_ref, wv_ref, b_ref, o_ref, sum_ref, sq_ref,
                        *, inv_n, inv_nm1):
    """Grid = (batch_tiles, n_tiles); reduction axis (n_tiles) is innermost."""
    k = pl.program_id(1)

    @pl.when(k == 0)
    def _():
        sum_ref[...] = jnp.zeros_like(sum_ref)
        sq_ref[...] = jnp.zeros_like(sq_ref)

    # Upcast per tile inside the kernel; accumulate in f32 (safe on v5e: no bf16 VALU).
    x = x_ref[...].astype(jnp.float32)               # [B_t, CT, N_t]
    sum_ref[...] += jnp.sum(x, axis=-1)              # [B_t, CT]
    sq_ref[...] += jnp.sum(x * x, axis=-1)           # [B_t, CT]

    @pl.when(k == pl.num_programs(1) - 1)
    def _():
        s = sum_ref[...]
        mean = s * inv_n                             # [B_t, CT]
        # unbiased variance (torch.var default, ddof=1), single-pass form
        var = (sq_ref[...] - s * mean) * inv_nm1     # [B_t, CT]
        # Tiny projection on the VPU: y = mean @ Wm + var @ Wv + b (no concat, no MXU).
        proj = (mean[:, :, None] * wm_ref[...][None, :, :]
                + var[:, :, None] * wv_ref[...][None, :, :])   # [B_t, CT, n_out_pad]
        y = jnp.sum(proj, axis=1) + b_ref[...]       # [B_t, n_out_pad]
        o_ref[...] = y.astype(o_ref.dtype)


def statistical_linear_baseline(x, w, b, *, n_tile=2048, b_tile=None):
    """
    x: [B, C*T, *spatial]  (any float dtype; streamed natively, upcast in-kernel)
    w: [n_outputs, 2*C*T]  (torch nn.Linear weight layout)
    b: [n_outputs]
    returns: [B, n_outputs] float32
    """
    B, CT = x.shape[0], x.shape[1]
    N = int(np.prod(x.shape[2:]))
    x_flat = x.reshape(B, CT, N)                     # keep native dtype, no host upcast

    n_out = w.shape[0]
    n_out_pad = max(128, -(-n_out // 128) * 128)     # lane-dense output slab

    # Split the projection weight (mean half / var half) and pad the lane axis.
    w_t = jnp.asarray(w, jnp.float32).T              # [2*CT, n_out]
    wm = jnp.zeros((CT, n_out_pad), jnp.float32).at[:, :n_out].set(w_t[:CT])
    wv = jnp.zeros((CT, n_out_pad), jnp.float32).at[:, :n_out].set(w_t[CT:])
    bp = jnp.zeros((1, n_out_pad), jnp.float32).at[:, :n_out].set(
        jnp.asarray(b, jnp.float32).reshape(1, n_out))

    # Reduction-axis tile: multiple of 128, capped by (padded) N. Zero padding is safe
    # for sum/sumsq accumulation because we divide by the true N at finalize.
    n_padded_min = max(128, -(-N // 128) * 128)
    n_tile = max(128, min((n_tile // 128) * 128, n_padded_min))
    N_pad = -(-N // n_tile) * n_tile
    if N_pad != N:
        x_flat = jnp.pad(x_flat, ((0, 0), (0, 0), (0, N_pad - N)))
    nk = N_pad // n_tile

    # Batch tile (small problem -> usually the whole batch).
    if b_tile is None:
        b_tile = B if B <= 8 else (8 if B % 8 == 0 else B)
    if B % b_tile != 0:
        b_tile = B
    nb = B // b_tile

    kernel = functools.partial(
        _stat_linear_kernel,
        inv_n=1.0 / float(N),
        inv_nm1=1.0 / float(max(N - 1, 1)),          # guard N == 1 (torch would give nan)
    )

    elem_bytes = jnp.dtype(x_flat.dtype).itemsize
    cost = pl.CostEstimate(
        flops=3 * B * CT * N_pad + 4 * B * CT * n_out_pad,
        transcendentals=0,
        bytes_accessed=B * CT * N_pad * elem_bytes
                       + 2 * CT * n_out_pad * 4 + B * n_out_pad * 4,
    )

    out = pl.pallas_call(
        kernel,
        out_shape=jax.ShapeDtypeStruct((B, n_out_pad), jnp.float32),
        grid_spec=pltpu.PrefetchScalarGridSpec(
            num_scalar_prefetch=0,
            grid=(nb, nk),                           # reduction axis last
            in_specs=[
                pl.BlockSpec((b_tile, CT, n_tile), lambda i, k: (i, 0, k)),
                pl.BlockSpec((CT, n_out_pad), lambda i, k: (0, 0)),
                pl.BlockSpec((CT, n_out_pad), lambda i, k: (0, 0)),
                pl.BlockSpec((1, n_out_pad), lambda i, k: (0, 0)),
            ],
            out_specs=pl.BlockSpec((b_tile, n_out_pad), lambda i, k: (i, 0)),
            scratch_shapes=[
                pltpu.VMEM((b_tile, CT), jnp.float32),   # running sum
                pltpu.VMEM((b_tile, CT), jnp.float32),   # running sum of squares
            ],
        ),
        compiler_params=pltpu.CompilerParams(
            dimension_semantics=("parallel", "arbitrary"),
            vmem_limit_bytes=32 * 1024 * 1024,       # safe on v5e/v6e/v7x; blocks are small
        ),
        cost_estimate=cost,
    )(x_flat, wm, wv, bp)

    return out[:, :n_out]


def _reference(x, w, b):
    B = x.shape[0]
    xf = x.reshape(B, x.shape[1], -1).astype(jnp.float32)
    mean = xf.mean(-1)
    var = xf.var(-1, ddof=1)
    feats = jnp.concatenate([mean, var], axis=1)
    return jnp.dot(feats, jnp.asarray(w, jnp.float32).T,
                   precision=jax.lax.Precision.HIGHEST) + jnp.asarray(b, jnp.float32)


if __name__ == "__main__":
    # Module hyperparameters (small, consistent with the forward semantics)
    n_outputs = 3
    seq_len = 8
    n_windows = 4
    input_channels = 2
    stats_per_time = 2
    B, H, W = 2, 8, 8
    CT = input_channels * seq_len                        # 16
    fan_in = input_channels * stats_per_time * seq_len   # 32 = 2*CT

    key = jax.random.PRNGKey(0)
    kx, kw, kb = jax.random.split(key, 3)

    # Input: [B, C*T, n_windows, H, W]; per-subject reduction over dims (1,2,3)
    x = jax.random.normal(kx, (B, CT, n_windows, H, W), dtype=jnp.float32)

    # Deterministic nn.Linear-style init: U(-1/sqrt(fan_in), 1/sqrt(fan_in))
    bound = 1.0 / np.sqrt(fan_in)
    w = jax.random.uniform(kw, (n_outputs, fan_in), minval=-bound, maxval=bound,
                           dtype=jnp.float32)
    b = jax.random.uniform(kb, (n_outputs,), minval=-bound, maxval=bound,
                           dtype=jnp.float32)

    y = statistical_linear_baseline(x, w, b)
    y = jax.block_until_ready(y)

    y_ref = _reference(x, w, b)
    np.testing.assert_allclose(np.asarray(y), np.asarray(y_ref), rtol=1e-4, atol=1e-5)

    print("KERNEL_OK")
</pallas_src>

<mosaic_0001>
module attributes {stable_mosaic.version = 11 : i64} {
  func.func @_stat_linear_kernel(%arg0: i32, %arg1: i32, %arg2: memref<2x16x256xf32, #tpu.memory_space<vmem>>, %arg3: memref<16x128xf32, #tpu.memory_space<vmem>>, %arg4: memref<16x128xf32, #tpu.memory_space<vmem>>, %arg5: memref<1x128xf32, #tpu.memory_space<vmem>>, %arg6: memref<2x128xf32, #tpu.memory_space<vmem>>, %arg7: memref<2x16xf32, #tpu.memory_space<vmem>>, %arg8: memref<2x16xf32, #tpu.memory_space<vmem>>) attributes {dimension_semantics = [#tpu.dimension_semantics<parallel>, #tpu.dimension_semantics<arbitrary>], iteration_bounds = array<i64: 1, 1>, scalar_prefetch = 0 : i64, scratch_operands = 2 : i64, tpu.core_type = #tpu.core_type<tc>, window_params = [{transform_indices = @transform_0, window_bounds = array<i64: 2, 16, 256>}, {pipeline_mode = #tpu.pipeline_mode<synchronous>, transform_indices = @transform_1, window_bounds = array<i64: 16, 128>}, {pipeline_mode = #tpu.pipeline_mode<synchronous>, transform_indices = @transform_2, window_bounds = array<i64: 16, 128>}, {pipeline_mode = #tpu.pipeline_mode<synchronous>, transform_indices = @transform_3, window_bounds = array<i64: 1, 128>}, {transform_indices = @transform_4, window_bounds = array<i64: 2, 128>}]} {
    %c0_i32 = arith.constant 0 : i32
    %0 = arith.cmpi eq, %arg1, %c0_i32 : i32
    %1 = arith.extui %0 : i1 to i32
    %c0_i32_0 = arith.constant 0 : i32
    %2 = arith.cmpi ne, %1, %c0_i32_0 : i32
    scf.if %2 {
      %cst_14 = arith.constant 0.000000e+00 : f32
      %16 = vector.broadcast %cst_14 : f32 to vector<2x16xf32>
      %c0_15 = arith.constant 0 : index
      %c0_16 = arith.constant 0 : index
      %17 = vector.load %arg7[%c0_15, %c0_16] : memref<2x16xf32, #tpu.memory_space<vmem>>, vector<2x16xf32>
      tpu.vector_store %arg7[%c0_15, %c0_16], %16 {strides = array<i32>} : memref<2x16xf32, #tpu.memory_space<vmem>>, vector<2x16xf32>,
      %cst_17 = arith.constant 0.000000e+00 : f32
      %18 = vector.broadcast %cst_17 : f32 to vector<2x16xf32>
      %c0_18 = arith.constant 0 : index
      %c0_19 = arith.constant 0 : index
      %19 = vector.load %arg8[%c0_18, %c0_19] : memref<2x16xf32, #tpu.memory_space<vmem>>, vector<2x16xf32>
      tpu.vector_store %arg8[%c0_18, %c0_19], %18 {strides = array<i32>} : memref<2x16xf32, #tpu.memory_space<vmem>>, vector<2x16xf32>,
    } else {
    }
    %c0 = arith.constant 0 : index
    %c0_1 = arith.constant 0 : index
    %c0_2 = arith.constant 0 : index
    %3 = vector.load %arg2[%c0, %c0_1, %c0_2] : memref<2x16x256xf32, #tpu.memory_space<vmem>>, vector<2x16x256xf32>
    %c0_3 = arith.constant 0 : index
    %c0_4 = arith.constant 0 : index
    %4 = vector.load %arg7[%c0_3, %c0_4] : memref<2x16xf32, #tpu.memory_space<vmem>>, vector<2x16xf32>
    %cst = arith.constant dense<0.000000e+00> : vector<2x16xf32>
    %5 = vector.multi_reduction <add>, %3, %cst [2] : vector<2x16x256xf32> to vector<2x16xf32>
    %6 = arith.addf %4, %5 : vector<2x16xf32>
    %c0_5 = arith.constant 0 : index
    %c0_6 = arith.constant 0 : index
    %7 = vector.load %arg7[%c0_5, %c0_6] : memref<2x16xf32, #tpu.memory_space<vmem>>, vector<2x16xf32>
    tpu.vector_store %arg7[%c0_5, %c0_6], %6 {strides = array<i32>} : memref<2x16xf32, #tpu.memory_space<vmem>>, vector<2x16xf32>,
    %c0_7 = arith.constant 0 : index
    %c0_8 = arith.constant 0 : index
    %8 = vector.load %arg8[%c0_7, %c0_8] : memref<2x16xf32, #tpu.memory_space<vmem>>, vector<2x16xf32>
    %9 = arith.mulf %3, %3 : vector<2x16x256xf32>
    %cst_9 = arith.constant dense<0.000000e+00> : vector<2x16xf32>
    %10 = vector.multi_reduction <add>, %9, %cst_9 [2] : vector<2x16x256xf32> to vector<2x16xf32>
    %11 = arith.addf %8, %10 : vector<2x16xf32>
    %c0_10 = arith.constant 0 : index
    %c0_11 = arith.constant 0 : index
    %12 = vector.load %arg8[%c0_10, %c0_11] : memref<2x16xf32, #tpu.memory_space<vmem>>, vector<2x16xf32>
    tpu.vector_store %arg8[%c0_10, %c0_11], %11 {strides = array<i32>} : memref<2x16xf32, #tpu.memory_space<vmem>>, vector<2x16xf32>,
    %c0_i32_12 = arith.constant 0 : i32
    %13 = arith.cmpi eq, %arg1, %c0_i32_12 : i32
    %14 = arith.extui %13 : i1 to i32
    %c0_i32_13 = arith.constant 0 : i32
    %15 = arith.cmpi ne, %14, %c0_i32_13 : i32
    scf.if %15 {
      %c0_14 = arith.constant 0 : index
      %c0_15 = arith.constant 0 : index
      %16 = vector.load %arg7[%c0_14, %c0_15] : memref<2x16xf32, #tpu.memory_space<vmem>>, vector<2x16xf32>
      %cst_16 = arith.constant 3.906250e-03 : f32
      %17 = vector.broadcast %cst_16 : f32 to vector<2x16xf32>
      %18 = arith.mulf %16, %17 : vector<2x16xf32>
      %c0_17 = arith.constant 0 : index
      %c0_18 = arith.constant 0 : index
      %19 = vector.load %arg8[%c0_17, %c0_18] : memref<2x16xf32, #tpu.memory_space<vmem>>, vector<2x16xf32>
      %20 = arith.mulf %16, %18 : vector<2x16xf32>
      %21 = arith.subf %19, %20 : vector<2x16xf32>
      %cst_19 = arith.constant 0.00392156886 : f32
      %22 = vector.broadcast %cst_19 : f32 to vector<2x16xf32>
      %23 = arith.mulf %21, %22 : vector<2x16xf32>
      %24 = vector.shape_cast %18 : vector<2x16xf32> to vector<2x16x1xf32>
      %c0_20 = arith.constant 0 : index
      %c0_21 = arith.constant 0 : index
      %25 = vector.load %arg3[%c0_20, %c0_21] : memref<16x128xf32, #tpu.memory_space<vmem>>, vector<16x128xf32>
      %26 = vector.shape_cast %25 : vector<16x128xf32> to vector<1x16x128xf32>
      %27 = vector.broadcast %24 : vector<2x16x1xf32> to vector<2x16x128xf32>
      %28 = vector.broadcast %26 : vector<1x16x128xf32> to vector<2x16x128xf32>
      %29 = arith.mulf %27, %28 : vector<2x16x128xf32>
      %30 = vector.shape_cast %23 : vector<2x16xf32> to vector<2x16x1xf32>
      %c0_22 = arith.constant 0 : index
      %c0_23 = arith.constant 0 : index
      %31 = vector.load %arg4[%c0_22, %c0_23] : memref<16x128xf32, #tpu.memory_space<vmem>>, vector<16x128xf32>
      %32 = vector.shape_cast %31 : vector<16x128xf32> to vector<1x16x128xf32>
      %33 = vector.broadcast %30 : vector<2x16x1xf32> to vector<2x16x128xf32>
      %34 = vector.broadcast %32 : vector<1x16x128xf32> to vector<2x16x128xf32>
      %35 = arith.mulf %33, %34 : vector<2x16x128xf32>
      %36 = arith.addf %29, %35 : vector<2x16x128xf32>
      %cst_24 = arith.constant dense<0.000000e+00> : vector<2x128xf32>
      %37 = vector.multi_reduction <add>, %36, %cst_24 [1] : vector<2x16x128xf32> to vector<2x128xf32>
      %c0_25 = arith.constant 0 : index
      %c0_26 = arith.constant 0 : index
      %38 = vector.load %arg5[%c0_25, %c0_26] : memref<1x128xf32, #tpu.memory_space<vmem>>, vector<1x128xf32>
      %39 = vector.broadcast %38 : vector<1x128xf32> to vector<2x128xf32>
      %40 = arith.addf %37, %39 : vector<2x128xf32>
      %c0_27 = arith.constant 0 : index
      %c0_28 = arith.constant 0 : index
      %41 = vector.load %arg6[%c0_27, %c0_28] : memref<2x128xf32, #tpu.memory_space<vmem>>, vector<2x128xf32>
      tpu.vector_store %arg6[%c0_27, %c0_28], %40 {strides = array<i32>} : memref<2x128xf32, #tpu.memory_space<vmem>>, vector<2x128xf32>,
    } else {
    }
    return
  }
  func.func @transform_0(%arg0: i32, %arg1: i32) -> (i32, i32, i32) {
    %c0_i32 = arith.constant 0 : i32
    %c0_i32_0 = arith.constant 0 : i32
    return %arg0, %c0_i32, %arg1 : i32, i32, i32
  }
  func.func @transform_1(%arg0: i32, %arg1: i32) -> (i32, i32) {
    %c0_i32 = arith.constant 0 : i32
    %c0_i32_0 = arith.constant 0 : i32
    %c0_i32_1 = arith.constant 0 : i32
    return %c0_i32, %c0_i32_0 : i32, i32
  }
  func.func @transform_2(%arg0: i32, %arg1: i32) -> (i32, i32) {
    %c0_i32 = arith.constant 0 : i32
    %c0_i32_0 = arith.constant 0 : i32
    %c0_i32_1 = arith.constant 0 : i32
    return %c0_i32, %c0_i32_0 : i32, i32
  }
  func.func @transform_3(%arg0: i32, %arg1: i32) -> (i32, i32) {
    %c0_i32 = arith.constant 0 : i32
    %c0_i32_0 = arith.constant 0 : i32
    %c0_i32_1 = arith.constant 0 : i32
    return %c0_i32, %c0_i32_0 : i32, i32
  }
  func.func @transform_4(%arg0: i32, %arg1: i32) -> (i32, i32) {
    %c0_i32 = arith.constant 0 : i32
    %c0_i32_0 = arith.constant 0 : i32
    return %arg0, %c0_i32 : i32, i32
  }
}

</mosaic_0001>

<llo_original>
// kernel: tpu_custom_call.1
$region0: #{tpu_custom_call.1}
  #allocation0 [shape = 'u32[]', space=smem, size = 0x4, offset = 0x4, fixed_abs, tag = 'smem constant byte address 0x4 - core index']
  #allocation1 [shape = 'u32[144,128]{1,0:T(1,128)}', space=vmem, size = 0x12000, scoped, tag = 'internal scratch']
  #allocation2 [shape = 'f32[2,16]{1,0:T(2,128)}', space=vmem, size = 0x400, scoped, tag = 'scratch operand']
  #allocation3 [shape = 'f32[2,16]{1,0:T(2,128)}', space=vmem, size = 0x400, scoped, tag = 'scratch operand']
  %s0 = inlined_call_operand.hbm [shape: f32[2,16,256], index: 0, kind: input, shape index: {}]
  %s1 = inlined_call_operand.hbm [shape: f32[16,128], index: 1, kind: input, shape index: {}]
  %s2 = inlined_call_operand.hbm [shape: f32[16,128], index: 2, kind: input, shape index: {}]
  %s3 = inlined_call_operand.vmem [shape: f32[1,128], index: 3, kind: input, shape index: {}]
  %s4 = inlined_call_operand.hbm [shape: f32[2,128], index: 4, kind: output, shape index: {}]
  %s5 = sld [smem:[#allocation0]]
  $region46: #{tpu_custom_call.1} parent=0
    _
  %s7 = ssub.s32 1, %s5
  %s8 = scalar_select 0, %s7, %s5
  $region1: #{tpu_custom_call.1} parent=0
    #allocation4 [shape = 'u8[32768]{0}', space=vmem, size = 0x8000, scoped, tag = 'input window, operand 0, single buffered']
    #allocation5 [shape = 's32[1]{0}', space=sflag, size = 0x4, scoped, tag = 'scoped memory for tpu_custom_call.1']
    #allocation6 [shape = 's32[1]{0}', space=sflag, size = 0x4, scoped, tag = 'scoped memory for tpu_custom_call.1']
    #allocation7 [shape = 'u8[8192]{0}', space=vmem, size = 0x2000, scoped, tag = 'input window, operand 1, single buffered']
    #allocation8 [shape = 's32[1]{0}', space=sflag, size = 0x4, scoped, tag = 'scoped memory for tpu_custom_call.1']
    #allocation9 [shape = 'u8[8192]{0}', space=vmem, size = 0x2000, scoped, tag = 'input window, operand 2, single buffered']
    #allocation10 [shape = 'u8[1024]{0}', space=vmem, size = 0x400, scoped, tag = 'output window, operand 0, single buffered']
    %9 = vsyncpa [#allocation5], 0
    %10 = vsyncpa [#allocation8], 0
    %11 = vsyncpa [#allocation6], 0
    // Predicated region
    $region2: #{tpu_custom_call.1} parent=1 // pred_check
      _
    $region3: #{tpu_custom_call.1} parent=1 // pred_check_branch
      %13 = sbr.rel (0) target = $region5
    $region4: #{tpu_custom_call.1} parent=1 // pred_region
      %s15 = ssub.s32 1024, 1024
      %16 = vsyncadd [#allocation5], %s15
      %s17 = sshll.u32 [#allocation4], 4
      %s18 = int_to_ptr.vmem [resolvable:$true] %s17
      %23 = dma.hbm_to_vmem [thread:$0]  %s0, 1024, %s18, [#allocation5], 256, 256, 16
    $region5: #{tpu_custom_call.1} parent=1 // pred_fallthru
      _
    // Predicated region
    $region6: #{tpu_custom_call.1} parent=1 // pred_check
      _
    $region7: #{tpu_custom_call.1} parent=1 // pred_check_branch
      %25 = sbr.rel (0) target = $region9
    $region8: #{tpu_custom_call.1} parent=1 // pred_region
      %s27 = ssub.s32 256, 256
      %28 = vsyncadd [#allocation8], %s27
      %s29 = sshll.u32 [#allocation7], 4
      %s30 = int_to_ptr.vmem [resolvable:$true] %s29
      %35 = dma.hbm_to_vmem [thread:$0]  %s1, 256, %s30, [#allocation8], 128, 128, 8
    $region9: #{tpu_custom_call.1} parent=1 // pred_fallthru
      _
    // Predicated region
    $region10: #{tpu_custom_call.1} parent=1 // pred_check
      _
    $region11: #{tpu_custom_call.1} parent=1 // pred_check_branch
      %37 = sbr.rel (0) target = $region13
    $region12: #{tpu_custom_call.1} parent=1 // pred_region
      %s39 = ssub.s32 256, 256
      %40 = vsyncadd [#allocation8], %s39
      %s41 = sshll.u32 [#allocation9], 4
      %s42 = int_to_ptr.vmem [resolvable:$true] %s41
      %47 = dma.hbm_to_vmem [thread:$0]  %s2, 256, %s42, [#allocation8], 128, 128, 8
    $region13: #{tpu_custom_call.1} parent=1 // pred_fallthru
      _
    // Predicated region
    $region14: #{tpu_custom_call.1} parent=1 // pred_check
      _
    $region15: #{tpu_custom_call.1} parent=1 // pred_check_branch
      %49 = sbr.rel (0) target = $region17
    $region16: #{tpu_custom_call.1} parent=1 // pred_region
      _
    $region17: #{tpu_custom_call.1} parent=1 // pred_fallthru
      _
    // Predicated region
    $region18: #{tpu_custom_call.1} parent=1 // pred_check
      _
    $region19: #{tpu_custom_call.1} parent=1 // pred_check_branch
      %51 = sbr.rel (0) target = $region21
    $region20: #{tpu_custom_call.1} parent=1 // pred_region
      %52 = dma.done [#allocation5], 1024
    $region21: #{tpu_custom_call.1} parent=1 // pred_fallthru
      _
    // Predicated region
    $region22: #{tpu_custom_call.1} parent=1 // pred_check
      _
    $region23: #{tpu_custom_call.1} parent=1 // pred_check_branch
      %54 = sbr.rel (0) target = $region25
    $region24: #{tpu_custom_call.1} parent=1 // pred_region
      %55 = dma.done [#allocation8], 256
    $region25: #{tpu_custom_call.1} parent=1 // pred_fallthru
      _
    // Predicated region
    $region26: #{tpu_custom_call.1} parent=1 // pred_check
      _
    $region27: #{tpu_custom_call.1} parent=1 // pred_check_branch
      %57 = sbr.rel (0) target = $region29
    $region28: #{tpu_custom_call.1} parent=1 // pred_region
      %58 = dma.done [#allocation8], 256
    $region29: #{tpu_custom_call.1} parent=1 // pred_fallthru
      _
    %p59 = scmp.eq.s32.totalorder 0, 0
    // Predicated region
    $region30: #{tpu_custom_call.1} parent=1 // pred_check
      %p60 = pneg %p59
    $region31: #{tpu_custom_call.1} parent=1 // pred_check_branch
      %62 = sbr.rel (%p60) target = $region33
    $region32: #{tpu_custom_call.1} parent=1 // pred_region
      %vm63 = vcmask 123904
      %64 = vst.msk [vmem:[#allocation2] sm:$0x3] %vm63, 0.0
      %65 = vst.msk [vmem:[#allocation3] sm:$0x3] %vm63, 0.0
    $region33: #{tpu_custom_call.1} parent=1 // pred_fallthru
      _
    %v66 = vld [vmem:[#allocation4] sm:$0xff]
    %v67 = vld [vmem:[#allocation4 + $0x8] sm:$0xff]
    %v68 = vld [vmem:[#allocation4 + $0x10] sm:$0xff]
    %v69 = vld [vmem:[#allocation4 + $0x18] sm:$0xff]
    %v70 = vld [vmem:[#allocation4 + $0x20] sm:$0xff]
    %v71 = vld [vmem:[#allocation4 + $0x28] sm:$0xff]
    %v72 = vld [vmem:[#allocation4 + $0x30] sm:$0xff]
    %v73 = vld [vmem:[#allocation4 + $0x38] sm:$0xff]
    %v74 = vld [vmem:[#allocation2] sm:$0x3]
    %v75 = vadd.f32 %v66, %v67
    %76 = vadd.xlane.f32.xlu0 %v75
    %v77 = vpop.xlane.xlu0 %76
    %v78 = vadd.f32 %v68, %v69
    %79 = vadd.xlane.f32.xlu0 %v78
    %v80 = vpop.xlane.xlu0 %79
    %v81 = vadd.f32 %v70, %v71
    %82 = vadd.xlane.f32.xlu0 %v81
    %v83 = vpop.xlane.xlu0 %82
    %v84 = vadd.f32 %v72, %v73
    %85 = vadd.xlane.f32.xlu0 %v84
    %v86 = vpop.xlane.xlu0 %85
    %v91 = vlaneseq
    %v92 = vand.u32 %v91, 127
    %v93 = vlaneseq
    %v94 = vshrl.u32 %v93, 7
    %v95 = vsub.s32 %v92, %v94
    %v96 = vrot.slane %v77, %v95
    %v97 = vadd.s32 %v92, 4294967288
    %v98 = vlaneseq
    %v99 = vshrl.u32 %v98, 7
    %v100 = vsub.s32 %v97, %v99
    %v101 = vrot.slane %v80, %v100
    %vm102 = vcmask 130112
    %v103 = vsel %vm102, %v101, %v96
    %v104 = vlaneseq
    %v105 = vshrl.u32 %v104, 7
    %v106 = vsub.s32 %v92, %v105
    %v107 = vrot.slane %v83, %v106
    %v108 = vlaneseq
    %v109 = vshrl.u32 %v108, 7
    %v110 = vsub.s32 %v97, %v109
    %v111 = vrot.slane %v86, %v110
    %v112 = vsel %vm102, %v111, %v107
    %vm113 = vcmask 1041409
    %v114 = vsel %vm113, %v112, %v103
    %v116 = vadd.f32 %v74, %v114
    %vm117 = vcmask 123904
    %118 = vst.msk [vmem:[#allocation2] sm:$0x3] %vm117, %v116
    %v119 = vld [vmem:[#allocation3] sm:$0x3]
    %v120 = vmul.f32 %v66, %v66
    %v121 = vmul.f32 %v67, %v67
    %v122 = vmul.f32 %v68, %v68
    %v123 = vmul.f32 %v69, %v69
    %v124 = vmul.f32 %v70, %v70
    %v125 = vmul.f32 %v71, %v71
    %v126 = vmul.f32 %v72, %v72
    %v127 = vmul.f32 %v73, %v73
    %v128 = vadd.f32 %v120, %v121
    %129 = vadd.xlane.f32.xlu0 %v128
    %v130 = vpop.xlane.xlu0 %129
    %v131 = vadd.f32 %v122, %v123
    %132 = vadd.xlane.f32.xlu0 %v131
    %v133 = vpop.xlane.xlu0 %132
    %v134 = vadd.f32 %v124, %v125
    %135 = vadd.xlane.f32.xlu0 %v134
    %v136 = vpop.xlane.xlu0 %135
    %v137 = vadd.f32 %v126, %v127
    %138 = vadd.xlane.f32.xlu0 %v137
    %v139 = vpop.xlane.xlu0 %138
    %v144 = vlaneseq
    %v145 = vshrl.u32 %v144, 7
    %v146 = vsub.s32 %v92, %v145
    %v147 = vrot.slane %v130, %v146
    %v148 = vlaneseq
    %v149 = vshrl.u32 %v148, 7
    %v150 = vsub.s32 %v97, %v149
    %v151 = vrot.slane %v133, %v150
    %v152 = vsel %vm102, %v151, %v147
    %v153 = vlaneseq
    %v154 = vshrl.u32 %v153, 7
    %v155 = vsub.s32 %v92, %v154
    %v156 = vrot.slane %v136, %v155
    %v157 = vlaneseq
    %v158 = vshrl.u32 %v157, 7
    %v159 = vsub.s32 %v97, %v158
    %v160 = vrot.slane %v139, %v159
    %v161 = vsel %vm102, %v160, %v156
    %v162 = vsel %vm113, %v161, %v152
    %v164 = vadd.f32 %v119, %v162
    %165 = vst.msk [vmem:[#allocation3] sm:$0x3] %vm117, %v164
    // Predicated region
    $region34: #{tpu_custom_call.1} parent=1 // pred_check
      %p166 = pneg %p59
    $region35: #{tpu_custom_call.1} parent=1 // pred_check_branch
      %168 = sbr.rel (%p166) target = $region37
    $region36: #{tpu_custom_call.1} parent=1 // pred_region
      %v169 = vld [vmem:[#allocation2] sm:$0x3]
      %v170 = vmul.f32 %v169, 0.00390625
      %v171 = vld [vmem:[#allocation3] sm:$0x3]
      %v172 = vmul.f32 %v169, %v170
      %v173 = vsub.f32 %v171, %v172
      %v174 = vmul.f32 %v173, 0.003921569
      %v175 = vlaneseq
      %v176 = vshrl.u32 %v175, 7
      %v177 = vsub.s32 0, %v176
      %v178 = vrot.slane %v170, %v177
      %180 = vbcast.lane.b32.xlu0 %v178, 256
      %v181 = vpop.permute.xlu0 %180
      %s183 = sor.u32 256, 8
      %184 = vbcast.lane.b32.xlu0 %v178, %s183
      %v185 = vpop.permute.xlu0 %184
      %v186 = vlaneseq
      %v187 = vshrl.u32 %v186, 7
      %v188 = vsub.s32 1, %v187
      %v189 = vrot.slane %v170, %v188
      %191 = vbcast.lane.b32.xlu0 %v189, 256
      %v192 = vpop.permute.xlu0 %191
      %s194 = sor.u32 256, 8
      %195 = vbcast.lane.b32.xlu0 %v189, %s194
      %v196 = vpop.permute.xlu0 %195
      %v197 = vld [vmem:[#allocation7] sm:$0xff]
      %v198 = vld [vmem:[#allocation7 + $0x8] sm:$0xff]
      %v199 = vmul.f32 %v181, %v197
      %v200 = vmul.f32 %v185, %v198
      %v201 = vmul.f32 %v192, %v197
      %v202 = vmul.f32 %v196, %v198
      %v203 = vlaneseq
      %v204 = vshrl.u32 %v203, 7
      %v205 = vsub.s32 0, %v204
      %v206 = vrot.slane %v174, %v205
      %208 = vbcast.lane.b32.xlu0 %v206, 256
      %v209 = vpop.permute.xlu0 %208
      %s211 = sor.u32 256, 8
      %212 = vbcast.lane.b32.xlu0 %v206, %s211
      %v213 = vpop.permute.xlu0 %212
      %v214 = vlaneseq
      %v215 = vshrl.u32 %v214, 7
      %v216 = vsub.s32 1, %v215
      %v217 = vrot.slane %v174, %v216
      %219 = vbcast.lane.b32.xlu0 %v217, 256
      %v220 = vpop.permute.xlu0 %219
      %s222 = sor.u32 256, 8
      %223 = vbcast.lane.b32.xlu0 %v217, %s222
      %v224 = vpop.permute.xlu0 %223
      %v225 = vld [vmem:[#allocation9] sm:$0xff]
      %v226 = vld [vmem:[#allocation9 + $0x8] sm:$0xff]
      %v227 = vmul.f32 %v209, %v225
      %v228 = vmul.f32 %v213, %v226
      %v229 = vmul.f32 %v220, %v225
      %v230 = vmul.f32 %v224, %v226
      %v231 = vadd.f32 %v199, %v227
      %v232 = vadd.f32 %v200, %v228
      %v233 = vadd.f32 %v201, %v229
      %v234 = vadd.f32 %v202, %v230
      %v235 = vadd.f32 %v231, %v232
      %v236 = vrot.slane %v235, 4
      %v237 = vadd.f32 %v235, %v236
      %v238 = vrot.slane %v237, 2
      %v239 = vadd.f32 %v237, %v238
      %v240 = vrot.slane %v239, 1
      %v241 = vadd.f32 %v239, %v240
      %v242 = vadd.f32 %v233, %v234
      %v243 = vrot.slane %v242, 4
      %v244 = vadd.f32 %v242, %v243
      %v245 = vrot.slane %v244, 2
      %v246 = vadd.f32 %v244, %v245
      %v247 = vrot.slane %v246, 1
      %v248 = vadd.f32 %v246, %v247
      %v249 = vld [vmem:[%s3] sm:$0x1]
      %v251 = vlaneseq
      %v252 = vshrl.u32 %v251, 7
      %v253 = vsub.s32 0, %v252
      %v254 = vrot.slane %v249, %v253
      %v256 = vadd.f32 %v241, %v254
      %v257 = vadd.f32 %v248, %v254
      %v260 = vrot.slane %v257, 7
      %v261 = vsel %vm113, %v260, %v256
      %263 = vst [vmem:[#allocation10] sm:$0x3] %v261
    $region37: #{tpu_custom_call.1} parent=1 // pred_fallthru
      _
    // Predicated region
    $region38: #{tpu_custom_call.1} parent=1 // pred_check
      _
    $region39: #{tpu_custom_call.1} parent=1 // pred_check_branch
      %265 = sbr.rel (0) target = $region41
    $region40: #{tpu_custom_call.1} parent=1 // pred_region
      %s267 = ssub.s32 32, 32
      %268 = vsyncadd [#allocation6], %s267
      %s270 = sshll.u32 [#allocation10], 4
      %s271 = int_to_ptr.vmem [resolvable:$true] %s270
      %273 = dma.vmem_to_hbm [thread:$0]  %s271, 32, %s4, [#allocation6]
    $region41: #{tpu_custom_call.1} parent=1 // pred_fallthru
      _
    // Predicated region
    $region42: #{tpu_custom_call.1} parent=1 // pred_check
      _
    $region43: #{tpu_custom_call.1} parent=1 // pred_check_branch
      %275 = sbr.rel (0) target = $region45
    $region44: #{tpu_custom_call.1} parent=1 // pred_region
      %276 = dma.done [#allocation6], 32
    $region45: #{tpu_custom_call.1} parent=1 // pred_fallthru
      _
    %277 = vsyncpa [#allocation5], 1
    %278 = vsyncpa [#allocation8], 1
    %279 = vsyncpa [#allocation6], 1

</llo_original>
